<compile_context>
chip_gen: v6e
topology: v6e:2x2x1
jax: 0.10.0
libtpu: 0.0.40
codegen_flags: <defaults>
</compile_context>

<pallas_src>
import jax
import jax.numpy as jnp
from jax.experimental import pallas as pl
from jax.experimental.pallas import tpu as pltpu


# --------------------------------------------------------------------------
# Kernels
# --------------------------------------------------------------------------

def lstm_cell_kernel(embed_ref, h_ref, c_ref,
                     w_e_ref, w_h_ref, b_ref,
                     hnew_ref, cnew_ref, hbf16_ref):
    """Fused LSTM cell: everything fits in VMEM, single invocation."""
    h = h_ref[...]                        # (B, H)  fp32
    c = c_ref[...]                        # (B, H)  fp32
    # bf16 MXU operands, fp32 accumulation; gate/state math stays fp32.
    gates = (jnp.dot(embed_ref[...], w_e_ref[...],
                     preferred_element_type=jnp.float32)
             + jnp.dot(h.astype(jnp.bfloat16), w_h_ref[...],
                       preferred_element_type=jnp.float32)
             + b_ref[...])                # (B, 4H) fp32
    H = h.shape[-1]
    # NOTE: at production H=512 these slices are 128-lane aligned.
    i_g = jax.nn.sigmoid(gates[:, 0 * H:1 * H])
    f_g = jax.nn.sigmoid(gates[:, 1 * H:2 * H])
    g_g = jnp.tanh(gates[:, 2 * H:3 * H])
    o_g = jax.nn.sigmoid(gates[:, 3 * H:4 * H])
    c_new = f_g * c + i_g * g_g
    h_new = o_g * jnp.tanh(c_new)
    cnew_ref[...] = c_new
    hnew_ref[...] = h_new
    hbf16_ref[...] = h_new.astype(jnp.bfloat16)


def proj_kernel(h_ref, wout_ref, bout_ref, logits_ref):
    """One vocab tile of the output projection: (B,H) @ (H,TV) + b, fp32 out."""
    logits_ref[...] = (jnp.dot(h_ref[...], wout_ref[...],
                               preferred_element_type=jnp.float32)
                       + bout_ref[...])


# --------------------------------------------------------------------------
# BlockSpec helper: apply pipeline_mode=pl.Buffered(n) when available,
# fall back to a plain BlockSpec so the kernel always runs.
# --------------------------------------------------------------------------

def _spec(block_shape, index_map, buffers=None):
    if buffers is not None:
        try:
            return pl.BlockSpec(block_shape, index_map,
                                pipeline_mode=pl.Buffered(buffers))
        except Exception:      # pragma: no cover - older jax without Buffered
            pass
    return pl.BlockSpec(block_shape, index_map)


# --------------------------------------------------------------------------
# One-time weight prep (hoisted out of the per-token decode step)
# --------------------------------------------------------------------------

def prepare_params(params, max_tile_v=8192):
    """Pre-fold / pre-transpose / pre-tile the weights.

    max_tile_v: target vocab tile width (sweep 4096-8192 at prod V).  The
    vocab is padded to a multiple of the chosen TV; pick TV with the padding
    trade-off in mind for small vocabularies.
    """
    emb = params["emb"]
    w_ih, w_hh = params["w_ih"], params["w_hh"]
    D = emb.shape[1]
    H = w_hh.shape[1]
    V = params["w_out"].shape[0]

    # Fold concat(embed, h) @ W_ih^T + h @ W_hh^T  ->  embed @ W_e + h @ W_h.
    w_e_t = jnp.asarray(w_ih[:, :D].T, jnp.bfloat16)              # (D, 4H)
    w_h_t = jnp.asarray(w_ih[:, D:].T + w_hh.T, jnp.bfloat16)     # (H, 4H)
    b = jnp.asarray(params["b_ih"] + params["b_hh"], jnp.float32)[None, :]

    # Vocab tile width: multiple of 128, capped by the (128-rounded) vocab.
    Vp128 = pl.cdiv(V, 128) * 128
    TV = max(128, (min(max_tile_v, Vp128) // 128) * 128)
    Vp = pl.cdiv(V, TV) * TV
    n_v = Vp // TV

    # Pre-tiled W_out^T: (n_v, H, TV) contiguous tiles in HBM -> each vocab
    # tile DMA is a single long burst.  Padded vocab columns are zero.
    wout_pad = jnp.zeros((Vp, H), jnp.float32).at[:V].set(
        jnp.asarray(params["w_out"], jnp.float32))
    wout_t = jnp.transpose(wout_pad.reshape(n_v, TV, H),
                           (0, 2, 1)).astype(jnp.bfloat16)         # (n_v,H,TV)
    bout = jnp.zeros((Vp,), jnp.float32).at[:V].set(
        jnp.asarray(params["b_out"], jnp.float32)).reshape(n_v, 1, TV)

    return {
        "emb": jnp.asarray(emb, jnp.bfloat16),
        "w_e_t": w_e_t, "w_h_t": w_h_t, "b": b,
        "wout_t": wout_t, "bout": bout,
        "D": D, "H": H, "V": V, "Vp": Vp, "TV": TV,
    }


# --------------------------------------------------------------------------
# Forward pass
# --------------------------------------------------------------------------

def decoder_forward(x, h, c, prep):
    """x: (B,) int32 token ids.  h, c: (B, H) fp32.

    Returns (logits (B,V) fp32, (h', c')).  NOTE: h and c are donated
    (aliased into h'/c') — callers must not reuse them after this call.
    """
    B = x.shape[0]
    D, H, V, Vp, TV = prep["D"], prep["H"], prep["V"], prep["Vp"], prep["TV"]
    n_v = Vp // TV

    # Glue: embedding row gather (B rows) stays in plain JAX.
    embed = jnp.take(prep["emb"], x, axis=0)                     # (B, D) bf16

    # ---- 1) LSTM cell (tiny, single invocation, whole arrays in VMEM) ----
    h_new, c_new, h_bf16 = pl.pallas_call(
        lstm_cell_kernel,
        out_shape=[
            jax.ShapeDtypeStruct((B, H), jnp.float32),   # h'
            jax.ShapeDtypeStruct((B, H), jnp.float32),   # c'
            jax.ShapeDtypeStruct((B, H), jnp.bfloat16),  # h' for the MXU
        ],
        input_output_aliases={1: 0, 2: 1},               # h->h', c->c'
    )(embed, h, c, prep["w_e_t"], prep["w_h_t"], prep["b"])

    # ---- 2) Output projection, vocab-tiled, "parallel" grid axis ----------
    logits_p = pl.pallas_call(
        proj_kernel,
        grid=(n_v,),
        in_specs=[
            # Grid-invariant h': single buffer is enough.
            _spec((B, H), lambda j: (0, 0), buffers=1),
            # Streamed contiguous W_out tile (leading dim squeezed out).
            _spec((None, H, TV), lambda j: (j, 0, 0), buffers=3),
            # Streamed b_out tile.
            _spec((None, 1, TV), lambda j: (j, 0, 0), buffers=3),
        ],
        out_specs=pl.BlockSpec((B, TV), lambda j: (0, j)),
        out_shape=jax.ShapeDtypeStruct((B, Vp), jnp.float32),
        compiler_params=pltpu.CompilerParams(
            # Independent vocab tiles -> safe to shard across TCs on v7x.
            dimension_semantics=("parallel",),
            # 40 MiB scoped VMEM: safe on v7x (64 MiB physical), required
            # raise on v5e (16 MiB default); bump to ~64 MiB on v6e/v5e.
            vmem_limit_bytes=40 * 1024 * 1024),
    )(h_bf16, prep["wout_t"], prep["bout"])

    logits = logits_p[:, :V] if Vp != V else logits_p
    return logits, (h_new, c_new)


# --------------------------------------------------------------------------
# Pure-JAX fp32 reference (PyTorch module semantics)
# --------------------------------------------------------------------------

def reference_forward(x, h, c, params):
    embed = jnp.take(params["emb"], x, axis=0)
    xin = jnp.concatenate([embed, h], axis=1)
    gates = (xin @ params["w_ih"].T + params["b_ih"]
             + h @ params["w_hh"].T + params["b_hh"])
    H = h.shape[1]
    i_g = jax.nn.sigmoid(gates[:, 0 * H:1 * H])
    f_g = jax.nn.sigmoid(gates[:, 1 * H:2 * H])
    g_g = jnp.tanh(gates[:, 2 * H:3 * H])
    o_g = jax.nn.sigmoid(gates[:, 3 * H:4 * H])
    c_new = f_g * c + i_g * g_g
    h_new = o_g * jnp.tanh(c_new)
    logits = h_new @ params["w_out"].T + params["b_out"]
    return logits, (h_new, c_new)


if __name__ == "__main__":
    # Small shapes consistent with the module (original uses D=H=512,
    # vocab in the tens of thousands).  V=300 is deliberately not a multiple
    # of 128, and max_tile_v=128 is used below purely to exercise the padded
    # multi-tile vocab path (Vp=384, grid=(3,)).  Production would use the
    # default max_tile_v=8192.
    B = 8            # batch
    V = 300          # vocab_size
    D = 32           # embedding_dim
    H = 32           # hidden_dim

    key = jax.random.PRNGKey(0)
    ks = jax.random.split(key, 10)
    scale = 1.0 / jnp.sqrt(H)
    params = {
        "emb":   jax.random.normal(ks[0], (V, D), jnp.float32),
        "w_ih":  jax.random.uniform(ks[1], (4 * H, D + H), jnp.float32, -scale, scale),
        "w_hh":  jax.random.uniform(ks[2], (4 * H, H), jnp.float32, -scale, scale),
        "b_ih":  jax.random.uniform(ks[3], (4 * H,), jnp.float32, -scale, scale),
        "b_hh":  jax.random.uniform(ks[4], (4 * H,), jnp.float32, -scale, scale),
        "w_out": jax.random.uniform(ks[5], (V, H), jnp.float32, -scale, scale),
        "b_out": jax.random.uniform(ks[6], (V,), jnp.float32, -scale, scale),
    }

    x = jax.random.randint(ks[7], (B,), 0, V, dtype=jnp.int32)      # token ids
    h0 = jax.random.normal(ks[8], (B, H), jnp.float32)
    c0 = jax.random.normal(ks[9], (B, H), jnp.float32)

    # Reference first (h0/c0 are donated into the kernel's h'/c' outputs).
    ref_logits, (ref_h1, ref_c1) = reference_forward(x, h0, c0, params)

    prep = prepare_params(params, max_tile_v=128)
    logits, (h1, c1) = decoder_forward(x, h0, c0, prep)
    jax.block_until_ready((logits, h1, c1))

    # bf16 weights + fp32 accumulation -> loosened tolerance vs fp32 reference.
    assert logits.shape == (B, V)
    assert jnp.allclose(logits, ref_logits, atol=2e-2, rtol=2e-2)
    assert jnp.allclose(h1, ref_h1, atol=2e-2, rtol=2e-2)
    assert jnp.allclose(c1, ref_c1, atol=2e-2, rtol=2e-2)

    print("KERNEL_OK")
</pallas_src>

<mosaic_0001>
module attributes {stable_mosaic.version = 11 : i64} {
  func.func @lstm_cell_kernel(%arg0: memref<8x32xbf16, #tpu.memory_space<vmem>>, %arg1: memref<8x32xf32, #tpu.memory_space<vmem>>, %arg2: memref<8x32xf32, #tpu.memory_space<vmem>>, %arg3: memref<32x128xbf16, #tpu.memory_space<vmem>>, %arg4: memref<32x128xbf16, #tpu.memory_space<vmem>>, %arg5: memref<1x128xf32, #tpu.memory_space<vmem>>, %arg6: memref<8x32xf32, #tpu.memory_space<vmem>>, %arg7: memref<8x32xf32, #tpu.memory_space<vmem>>, %arg8: memref<8x32xbf16, #tpu.memory_space<vmem>>) attributes {dimension_semantics = [], scalar_prefetch = 0 : i64, scratch_operands = 0 : i64, tpu.core_type = #tpu.core_type<tc>} {
    %c0 = arith.constant 0 : index
    %c0_0 = arith.constant 0 : index
    %0 = vector.load %arg1[%c0, %c0_0] : memref<8x32xf32, #tpu.memory_space<vmem>>, vector<8x32xf32>
    %c0_1 = arith.constant 0 : index
    %c0_2 = arith.constant 0 : index
    %1 = vector.load %arg2[%c0_1, %c0_2] : memref<8x32xf32, #tpu.memory_space<vmem>>, vector<8x32xf32>
    %c0_3 = arith.constant 0 : index
    %c0_4 = arith.constant 0 : index
    %2 = vector.load %arg0[%c0_3, %c0_4] : memref<8x32xbf16, #tpu.memory_space<vmem>>, vector<8x32xbf16>
    %c0_5 = arith.constant 0 : index
    %c0_6 = arith.constant 0 : index
    %3 = vector.load %arg3[%c0_5, %c0_6] : memref<32x128xbf16, #tpu.memory_space<vmem>>, vector<32x128xbf16>
    %cst = arith.constant dense<0.000000e+00> : vector<8x128xf32>
    %4 = tpu.matmul %2, %3, %cst {dimension_numbers = #tpu.dot_dimension_numbers<[1], [0], [0], [1], [0, 0, 1, 1], [], []>} : vector<8x32xbf16>, vector<32x128xbf16>, vector<8x128xf32> -> vector<8x128xf32>
    %5 = arith.truncf %0 : vector<8x32xf32> to vector<8x32xbf16>
    %c0_7 = arith.constant 0 : index
    %c0_8 = arith.constant 0 : index
    %6 = vector.load %arg4[%c0_7, %c0_8] : memref<32x128xbf16, #tpu.memory_space<vmem>>, vector<32x128xbf16>
    %cst_9 = arith.constant dense<0.000000e+00> : vector<8x128xf32>
    %7 = tpu.matmul %5, %6, %cst_9 {dimension_numbers = #tpu.dot_dimension_numbers<[1], [0], [0], [1], [0, 0, 1, 1], [], []>} : vector<8x32xbf16>, vector<32x128xbf16>, vector<8x128xf32> -> vector<8x128xf32>
    %8 = arith.addf %4, %7 : vector<8x128xf32>
    %c0_10 = arith.constant 0 : index
    %c0_11 = arith.constant 0 : index
    %9 = vector.load %arg5[%c0_10, %c0_11] : memref<1x128xf32, #tpu.memory_space<vmem>>, vector<1x128xf32>
    %10 = vector.broadcast %9 : vector<1x128xf32> to vector<8x128xf32>
    %11 = arith.addf %8, %10 : vector<8x128xf32>
    %12 = vector.extract_strided_slice %11 {offsets = [0, 0], sizes = [8, 32], strides = [1, 1]} : vector<8x128xf32> to vector<8x32xf32>
    %13 = arith.negf %12 : vector<8x32xf32>
    %14 = math.exp %13 : vector<8x32xf32>
    %cst_12 = arith.constant 1.000000e+00 : f32
    %15 = vector.broadcast %cst_12 : f32 to vector<8x32xf32>
    %16 = arith.addf %15, %14 : vector<8x32xf32>
    %17 = arith.divf %15, %16 : vector<8x32xf32>
    %18 = vector.extract_strided_slice %11 {offsets = [0, 32], sizes = [8, 32], strides = [1, 1]} : vector<8x128xf32> to vector<8x32xf32>
    %19 = arith.negf %18 : vector<8x32xf32>
    %20 = math.exp %19 : vector<8x32xf32>
    %cst_13 = arith.constant 1.000000e+00 : f32
    %21 = vector.broadcast %cst_13 : f32 to vector<8x32xf32>
    %22 = arith.addf %21, %20 : vector<8x32xf32>
    %23 = arith.divf %21, %22 : vector<8x32xf32>
    %24 = vector.extract_strided_slice %11 {offsets = [0, 64], sizes = [8, 32], strides = [1, 1]} : vector<8x128xf32> to vector<8x32xf32>
    %25 = math.tanh %24 : vector<8x32xf32>
    %26 = vector.extract_strided_slice %11 {offsets = [0, 96], sizes = [8, 32], strides = [1, 1]} : vector<8x128xf32> to vector<8x32xf32>
    %27 = arith.negf %26 : vector<8x32xf32>
    %28 = math.exp %27 : vector<8x32xf32>
    %cst_14 = arith.constant 1.000000e+00 : f32
    %29 = vector.broadcast %cst_14 : f32 to vector<8x32xf32>
    %30 = arith.addf %29, %28 : vector<8x32xf32>
    %31 = arith.divf %29, %30 : vector<8x32xf32>
    %32 = arith.mulf %23, %1 : vector<8x32xf32>
    %33 = arith.mulf %17, %25 : vector<8x32xf32>
    %34 = arith.addf %32, %33 : vector<8x32xf32>
    %35 = math.tanh %34 : vector<8x32xf32>
    %36 = arith.mulf %31, %35 : vector<8x32xf32>
    %c0_15 = arith.constant 0 : index
    %c0_16 = arith.constant 0 : index
    %37 = vector.load %arg7[%c0_15, %c0_16] : memref<8x32xf32, #tpu.memory_space<vmem>>, vector<8x32xf32>
    tpu.vector_store %arg7[%c0_15, %c0_16], %34 {strides = array<i32>} : memref<8x32xf32, #tpu.memory_space<vmem>>, vector<8x32xf32>,
    %c0_17 = arith.constant 0 : index
    %c0_18 = arith.constant 0 : index
    %38 = vector.load %arg6[%c0_17, %c0_18] : memref<8x32xf32, #tpu.memory_space<vmem>>, vector<8x32xf32>
    tpu.vector_store %arg6[%c0_17, %c0_18], %36 {strides = array<i32>} : memref<8x32xf32, #tpu.memory_space<vmem>>, vector<8x32xf32>,
    %39 = arith.truncf %36 : vector<8x32xf32> to vector<8x32xbf16>
    %c0_19 = arith.constant 0 : index
    %c0_20 = arith.constant 0 : index
    %40 = vector.load %arg8[%c0_19, %c0_20] : memref<8x32xbf16, #tpu.memory_space<vmem>>, vector<8x32xbf16>
    tpu.vector_store %arg8[%c0_19, %c0_20], %39 {strides = array<i32>} : memref<8x32xbf16, #tpu.memory_space<vmem>>, vector<8x32xbf16>,
    return
  }
}

</mosaic_0001>

<llo_original>
// kernel: tpu_custom_call.1
$region0: #{tpu_custom_call.1}
  #allocation0 [shape = 'u32[]', space=smem, size = 0x4, offset = 0x4, fixed_abs, tag = 'smem constant byte address 0x4 - core index']
  #allocation1 [shape = 'u32[144,128]{1,0:T(1,128)}', space=vmem, size = 0x12000, scoped, tag = 'internal scratch']
  %s0 = inlined_call_operand.vmem [shape: bf16[8,32], index: 0, kind: input, shape index: {}]
  %s1 = inlined_call_operand.hbm [shape: f32[8,32], index: 1, kind: input, shape index: {}, may-alias: {1,6}]
  %s2 = inlined_call_operand.hbm [shape: f32[8,32], index: 2, kind: input, shape index: {}, may-alias: {2,7}]
  %s3 = inlined_call_operand.vmem [shape: bf16[32,128], index: 3, kind: input, shape index: {}]
  %s4 = inlined_call_operand.vmem [shape: bf16[32,128], index: 4, kind: input, shape index: {}]
  %s5 = inlined_call_operand.hbm [shape: f32[1,128], index: 5, kind: input, shape index: {}]
  %s6 = inlined_call_operand.hbm [shape: f32[8,32], index: 6, kind: output, shape index: {0}, may-alias: {1,6}]
  %s7 = inlined_call_operand.hbm [shape: f32[8,32], index: 7, kind: output, shape index: {1}, may-alias: {2,7}]
  %s8 = inlined_call_operand.hbm [shape: bf16[8,32], index: 8, kind: output, shape index: {2}]
  %9 = xla_tuple %s6, %s7, %s8
  %s10 = sld [smem:[#allocation0]]
  $region62: #{tpu_custom_call.1} parent=0
    _
  %s12 = ssub.s32 1, %s10
  %s13 = scalar_select 0, %s12, %s10
  $region1: #{tpu_custom_call.1} parent=0
    #allocation2 [shape = 'u8[4096]{0}', space=vmem, size = 0x1000, scoped, tag = 'input window, operand 1, single buffered']
    #allocation3 [shape = 's32[1]{0}', space=sflag, size = 0x4, scoped, tag = 'scoped memory for tpu_custom_call.1']
    #allocation4 [shape = 's32[1]{0}', space=sflag, size = 0x4, scoped, tag = 'scoped memory for tpu_custom_call.1']
    #allocation5 [shape = 'u8[4096]{0}', space=vmem, size = 0x1000, scoped, tag = 'input window, operand 2, single buffered']
    #allocation6 [shape = 's32[1]{0}', space=sflag, size = 0x4, scoped, tag = 'scoped memory for tpu_custom_call.1']
    #allocation7 [shape = 'u8[512]{0}', space=vmem, size = 0x400, scoped, tag = 'input window, operand 5, single buffered']
    #allocation8 [shape = 'u8[4096]{0}', space=vmem, size = 0x1000, scoped, tag = 'output window, operand 0, single buffered']
    #allocation9 [shape = 'u8[4096]{0}', space=vmem, size = 0x1000, scoped, tag = 'output window, operand 1, single buffered']
    #allocation10 [shape = 's32[1]{0}', space=sflag, size = 0x4, scoped, tag = 'scoped memory for tpu_custom_call.1']
    #allocation11 [shape = 'u8[2048]{0}', space=vmem, size = 0x800, scoped, tag = 'output window, operand 2, single buffered']
    %14 = vsyncpa [#allocation3], 0
    %15 = vsyncpa [#allocation6], 0
    %16 = vsyncpa [#allocation4], 0
    %17 = vsyncpa [#allocation10], 0
    // Predicated region
    $region2: #{tpu_custom_call.1} parent=1 // pred_check
      _
    $region3: #{tpu_custom_call.1} parent=1 // pred_check_branch
      %19 = sbr.rel (0) target = $region5
    $region4: #{tpu_custom_call.1} parent=1 // pred_region
      _
    $region5: #{tpu_custom_call.1} parent=1 // pred_fallthru
      _
    // Predicated region
    $region6: #{tpu_custom_call.1} parent=1 // pred_check
      _
    $region7: #{tpu_custom_call.1} parent=1 // pred_check_branch
      %21 = sbr.rel (0) target = $region9
    $region8: #{tpu_custom_call.1} parent=1 // pred_region
      %s23 = ssub.s32 128, 128
      %24 = vsyncadd [#allocation3], %s23
      %s26 = sshll.u32 [#allocation2], 4
      %s27 = int_to_ptr.vmem [resolvable:$true] %s26
      %29 = dma.hbm_to_vmem [thread:$0]  %s1, 128, %s27, [#allocation3]
    $region9: #{tpu_custom_call.1} parent=1 // pred_fallthru
      _
    // Predicated region
    $region10: #{tpu_custom_call.1} parent=1 // pred_check
      _
    $region11: #{tpu_custom_call.1} parent=1 // pred_check_branch
      %31 = sbr.rel (0) target = $region13
    $region12: #{tpu_custom_call.1} parent=1 // pred_region
      %s33 = ssub.s32 128, 128
      %34 = vsyncadd [#allocation6], %s33
      %s36 = sshll.u32 [#allocation5], 4
      %s37 = int_to_ptr.vmem [resolvable:$true] %s36
      %39 = dma.hbm_to_vmem [thread:$0]  %s2, 128, %s37, [#allocation6]
    $region13: #{tpu_custom_call.1} parent=1 // pred_fallthru
      _
    // Predicated region
    $region14: #{tpu_custom_call.1} parent=1 // pred_check
      _
    $region15: #{tpu_custom_call.1} parent=1 // pred_check_branch
      %41 = sbr.rel (0) target = $region17
    $region16: #{tpu_custom_call.1} parent=1 // pred_region
      _
    $region17: #{tpu_custom_call.1} parent=1 // pred_fallthru
      _
    // Predicated region
    $region18: #{tpu_custom_call.1} parent=1 // pred_check
      _
    $region19: #{tpu_custom_call.1} parent=1 // pred_check_branch
      %43 = sbr.rel (0) target = $region21
    $region20: #{tpu_custom_call.1} parent=1 // pred_region
      _
    $region21: #{tpu_custom_call.1} parent=1 // pred_fallthru
      _
    // Predicated region
    $region22: #{tpu_custom_call.1} parent=1 // pred_check
      _
    $region23: #{tpu_custom_call.1} parent=1 // pred_check_branch
      %45 = sbr.rel (0) target = $region25
    $region24: #{tpu_custom_call.1} parent=1 // pred_region
      %s47 = ssub.s32 16, 16
      %48 = vsyncadd [#allocation6], %s47
      %s50 = sshll.u32 [#allocation7], 4
      %s51 = int_to_ptr.vmem [resolvable:$true] %s50
      %53 = dma.hbm_to_vmem [thread:$0]  %s5, 16, %s51, [#allocation6]
    $region25: #{tpu_custom_call.1} parent=1 // pred_fallthru
      _
    // Predicated region
    $region26: #{tpu_custom_call.1} parent=1 // pred_check
      _
    $region27: #{tpu_custom_call.1} parent=1 // pred_check_branch
      %55 = sbr.rel (0) target = $region29
    $region28: #{tpu_custom_call.1} parent=1 // pred_region
      %56 = dma.done [#allocation3], 128
    $region29: #{tpu_custom_call.1} parent=1 // pred_fallthru
      _
    // Predicated region
    $region30: #{tpu_custom_call.1} parent=1 // pred_check
      _
    $region31: #{tpu_custom_call.1} parent=1 // pred_check_branch
      %58 = sbr.rel (0) target = $region33
    $region32: #{tpu_custom_call.1} parent=1 // pred_region
      %59 = dma.done [#allocation6], 128
    $region33: #{tpu_custom_call.1} parent=1 // pred_fallthru
      _
    // Predicated region
    $region34: #{tpu_custom_call.1} parent=1 // pred_check
      _
    $region35: #{tpu_custom_call.1} parent=1 // pred_check_branch
      %61 = sbr.rel (0) target = $region37
    $region36: #{tpu_custom_call.1} parent=1 // pred_region
      %62 = dma.done [#allocation6], 16
    $region37: #{tpu_custom_call.1} parent=1 // pred_fallthru
      _
    %v64 = vld [vmem:[#allocation2] sm:$0xff]
    %v65 = vld [vmem:[#allocation5] sm:$0xff]
    %v66 = vld [vmem:[%s0] sm:$0xf]
    %v67 = vld [vmem:[%s3] sm:$0xf]
    %v68 = vld [vmem:[%s3 + $0x4] sm:$0xf]
    %v69 = vld [vmem:[%s3 + $0x8] sm:$0xf]
    %v70 = vld [vmem:[%s3 + $0xc] sm:$0xf]
    %v71 = vpack.c.bf16 %v64, %v64
    %v72 = vld [vmem:[%s4] sm:$0xf]
    %v73 = vld [vmem:[%s4 + $0x4] sm:$0xf]
    %v74 = vld [vmem:[%s4 + $0x8] sm:$0xf]
    %v75 = vld [vmem:[%s4 + $0xc] sm:$0xf]
    %v80 = vunpack.c.l.b16 %v72
    %v81 = vunpack.c.l.b16 %v73
    %v82 = vunpack.c.l.b16 %v74
    %v83 = vunpack.c.l.b16 %v75
    %v84 = vpack.c.b16 %v81, %v80
    %v85 = vpack.c.b16 %v83, %v82
    %vm88 = vcmask 261120
    %v90 = vsel %vm88, %v71, 0
    %92 = vmatprep.subr.bf16.mxu0 0
    %93 = vmatpush1.bf16.msra.mxu0 0
    %94 = vmatprep.subr.bf16.mxu0 0
    %95 = vmatpush1.bf16.msra.mxu0 0
    %96 = vmatprep.subr.bf16.mxu0 0
    %97 = vmatpush1.bf16.msra.mxu0 0
    %98 = vmatprep.subr.bf16.mxu0 0
    %99 = vmatpush1.bf16.msra.mxu0 0
    %100 = vmatprep.subr.bf16.mxu0 0
    %101 = vmatpush1.bf16.msra.mxu0 0
    %102 = vmatprep.subr.bf16.mxu0 0
    %103 = vmatpush1.bf16.msra.mxu0 0
    %104 = vmatprep.subr.bf16.mxu0 0
    %105 = vmatpush1.bf16.msra.mxu0 %v85
    %106 = vmatprep.subr.bf16.mxu0 0
    %107 = vmatpush1.bf16.msra.mxu0 %v84
    %108 = vmatprep.subr.bf16.mxu0 0
    %109 = vmatpush2.bf16.msra.mxu0 0
    %110 = vmatprep.subr.bf16.mxu0 0
    %111 = vmatpush2.bf16.msra.mxu0 0
    %112 = vmatprep.subr.bf16.mxu0 0
    %113 = vmatpush2.bf16.msra.mxu0 0
    %114 = vmatprep.subr.bf16.mxu0 0
    %115 = vmatpush2.bf16.msra.mxu0 0
    %116 = vmatprep.subr.bf16.mxu0 0
    %117 = vmatpush2.bf16.msra.mxu0 0
    %118 = vmatprep.subr.bf16.mxu0 0
    %119 = vmatpush2.bf16.msra.mxu0 0
    %120 = vmatprep.subr.bf16.mxu0 0
    %121 = vmatpush2.bf16.msra.mxu0 0
    %122 = vmatprep.subr.bf16.mxu0 0
    %123 = vmatpush2.bf16.msra.mxu0 0
    %124 = vmatprep.mubr.bf16.mxu0 0
    %125 = vmatmul.mubr.bf16.gmra.mxu0 %v90
    %v126 = vpop.f32.mrf.mxu0
    %v127 = vadd.f32 0.0, %v126
    %v128 = vpop.f32.mrf.mxu0
    %v129 = vpop.f32.mrf.mxu0
    %v130 = vpop.f32.mrf.mxu0
    %131 = vdwg.mxu0
    %v136 = vunpack.c.l.b16 %v67
    %v137 = vunpack.c.l.b16 %v68
    %v138 = vunpack.c.l.b16 %v69
    %v139 = vunpack.c.l.b16 %v70
    %v140 = vpack.c.b16 %v137, %v136
    %v141 = vpack.c.b16 %v139, %v138
    %v145 = vsel %vm88, %v66, 0
    %147 = vmatprep.subr.bf16.mxu0 0
    %148 = vmatpush1.bf16.msra.mxu0 0
    %149 = vmatprep.subr.bf16.mxu0 0
    %150 = vmatpush1.bf16.msra.mxu0 0
    %151 = vmatprep.subr.bf16.mxu0 0
    %152 = vmatpush1.bf16.msra.mxu0 0
    %153 = vmatprep.subr.bf16.mxu0 0
    %154 = vmatpush1.bf16.msra.mxu0 0
    %155 = vmatprep.subr.bf16.mxu0 0
    %156 = vmatpush1.bf16.msra.mxu0 0
    %157 = vmatprep.subr.bf16.mxu0 0
    %158 = vmatpush1.bf16.msra.mxu0 0
    %159 = vmatprep.subr.bf16.mxu0 0
    %160 = vmatpush1.bf16.msra.mxu0 %v141
    %161 = vmatprep.subr.bf16.mxu0 0
    %162 = vmatpush1.bf16.msra.mxu0 %v140
    %163 = vmatprep.subr.bf16.mxu0 0
    %164 = vmatpush2.bf16.msra.mxu0 0
    %165 = vmatprep.subr.bf16.mxu0 0
    %166 = vmatpush2.bf16.msra.mxu0 0
    %167 = vmatprep.subr.bf16.mxu0 0
    %168 = vmatpush2.bf16.msra.mxu0 0
    %169 = vmatprep.subr.bf16.mxu0 0
    %170 = vmatpush2.bf16.msra.mxu0 0
    %171 = vmatprep.subr.bf16.mxu0 0
    %172 = vmatpush2.bf16.msra.mxu0 0
    %173 = vmatprep.subr.bf16.mxu0 0
    %174 = vmatpush2.bf16.msra.mxu0 0
    %175 = vmatprep.subr.bf16.mxu0 0
    %176 = vmatpush2.bf16.msra.mxu0 0
    %177 = vmatprep.subr.bf16.mxu0 0
    %178 = vmatpush2.bf16.msra.mxu0 0
    %179 = vmatprep.mubr.bf16.mxu0 0
    %180 = vmatmul.mubr.bf16.gmra.mxu0 %v145
    %v181 = vpop.f32.mrf.mxu0
    %v182 = vadd.f32 %v127, %v181
    %v183 = vpop.f32.mrf.mxu0
    %v184 = vpop.f32.mrf.mxu0
    %v185 = vpop.f32.mrf.mxu0
    %186 = vdwg.mxu0
    %v187 = vld [vmem:[#allocation7] sm:$0x1]
    %v189 = vlaneseq
    %v190 = vshrl.u32 %v189, 7
    %v191 = vsub.s32 0, %v190
    %v192 = vrot.slane %v187, %v191
    %v194 = vadd.f32 %v182, %v192
    %v195 = vxor.u32 %v194, 2147483648
    %v196 = vmul.f32 %v195, 1.442695
    %v197 = vpow.pop %v196
    %v198 = vadd.f32 %v197, 1.0
    %v199 = vrcp.pop %v198
    %v200 = vmul.f32 1.0, %v199
    %v201 = vtanh.pop %v194
    %203 = vrot.lane.b32.xlu0 %v65, 32
    %v204 = vpop.permute.xlu0 %203
    %v206 = vmul.f32 %v200, %v204
    %208 = vrot.lane.b32.xlu0 %v201, 64
    %v209 = vpop.permute.xlu0 %208
    %v211 = vmul.f32 %v200, %v209
    %213 = vrot.lane.b32.xlu0 %v211, 32
    %v214 = vpop.permute.xlu0 %213
    %v216 = vadd.f32 %v206, %v214
    %v217 = vtanh.pop %v216
    %219 = vrot.lane.b32.xlu0 %v217, 64
    %v220 = vpop.permute.xlu0 %219
    %v222 = vmul.f32 %v200, %v220
    %224 = vrot.lane.b32.xlu0 %v216, 96
    %v225 = vpop.permute.xlu0 %224
    %227 = vst.msk [vmem:[#allocation9] sm:$0xff] %vm88, %v225
    %229 = vrot.lane.b32.xlu0 %v222, 32
    %v230 = vpop.permute.xlu0 %229
    %232 = vst.msk [vmem:[#allocation8] sm:$0xff] %vm88, %v230
    %v233 = vpack.c.bf16 %v222, %v222
    %v235 = vunpack.c.l.b16 %v233
    %v236 = vpack.c.b16 %v235, %v235
    %237 = vrot.lane.b32.xlu0 %v236, 32
    %v238 = vpop.permute.xlu0 %237
    %vm240 = vcmask 257024
    %241 = vst.msk [vmem:[#allocation11] sm:$0xf] %vm240, %v238
    // Predicated region
    $region38: #{tpu_custom_call.1} parent=1 // pred_check
      _
    $region39: #{tpu_custom_call.1} parent=1 // pred_check_branch
      %243 = sbr.rel (0) target = $region41
    $region40: #{tpu_custom_call.1} parent=1 // pred_region
      %s245 = ssub.s32 128, 128
      %246 = vsyncadd [#allocation4], %s245
      %s248 = sshll.u32 [#allocation8], 4
      %s249 = int_to_ptr.vmem [resolvable:$true] %s248
      %251 = dma.vmem_to_hbm [thread:$0]  %s249, 128, %s6, [#allocation4]
    $region41: #{tpu_custom_call.1} parent=1 // pred_fallthru
      _
    // Predicated region
    $region42: #{tpu_custom_call.1} parent=1 // pred_check
      _
    $region43: #{tpu_custom_call.1} parent=1 // pred_check_branch
      %253 = sbr.rel (0) target = $region45
    $region44: #{tpu_custom_call.1} parent=1 // pred_region
      %s255 = ssub.s32 128, 128
      %256 = vsyncadd [#allocation10], %s255
      %s258 = sshll.u32 [#allocation9], 4
      %s259 = int_to_ptr.vmem [resolvable:$true] %s258
      %261 = dma.vmem_to_hbm [thread:$0]  %s259, 128, %s7, [#allocation10]
    $region45: #{tpu_custom_call.1} parent=1 // pred_fallthru
      _
    // Predicated region
    $region46: #{tpu_custom_call.1} parent=1 // pred_check
      _
    $region47: #{tpu_custom_call.1} parent=1 // pred_check_branch
      %263 = sbr.rel (0) target = $region49
    $region48: #{tpu_custom_call.1} parent=1 // pred_region
      %s265 = ssub.s32 64, 64
      %266 = vsyncadd [#allocation10], %s265
      %s268 = sshll.u32 [#allocation11], 4
      %s269 = int_to_ptr.vmem [resolvable:$true] %s268
      %271 = dma.vmem_to_hbm [thread:$0]  %s269, 64, %s8, [#allocation10]
    $region49: #{tpu_custom_call.1} parent=1 // pred_fallthru
      _
    // Predicated region
    $region50: #{tpu_custom_call.1} parent=1 // pred_check
      _
    $region51: #{tpu_custom_call.1} parent=1 // pred_check_branch
      %273 = sbr.rel (0) target = $region53
    $region52: #{tpu_custom_call.1} parent=1 // pred_region
      %274 = dma.done [#allocation4], 128
    $region53: #{tpu_custom_call.1} parent=1 // pred_fallthru
      _
    // Predicated region
    $region54: #{tpu_custom_call.1} parent=1 // pred_check
      _
    $region55: #{tpu_custom_call.1} parent=1 // pred_check_branch
      %276 = sbr.rel (0) target = $region57
    $region56: #{tpu_custom_call.1} parent=1 // pred_region
      %277 = dma.done [#allocation10], 128
    $region57: #{tpu_custom_call.1} parent=1 // pred_fallthru
      _
    // Predicated region
    $region58: #{tpu_custom_call.1} parent=1 // pred_check
      _
    $region59: #{tpu_custom_call.1} parent=1 // pred_check_branch
      %279 = sbr.rel (0) target = $region61
    $region60: #{tpu_custom_call.1} parent=1 // pred_region
      %280 = dma.done [#allocation10], 64
    $region61: #{tpu_custom_call.1} parent=1 // pred_fallthru
      _
    %281 = vsyncpa [#allocation3], 1
    %282 = vsyncpa [#allocation6], 1
    %283 = vsyncpa [#allocation4], 1
    %284 = vsyncpa [#allocation10], 1

</llo_original>
